<compile_context>
chip_gen: v6e
topology: v6e:2x2x1
jax: 0.10.0
libtpu: 0.0.40
codegen_flags: <defaults>
</compile_context>

<pallas_src>
import functools

import jax
import jax.numpy as jnp
import numpy as np
from jax import lax
from jax.experimental import pallas as pl
from jax.experimental.pallas import tpu as pltpu


# ----------------------------------------------------------------------------
# Kernel body: fused 3x3 conv (padding=1) on a lane-dense (Cin, B*H*W) slab,
# expressed as a single im2col MXU matmul.
# ----------------------------------------------------------------------------
def _conv3x3_ps_kernel(x_ref, w_ref, b_ref, m_ref, o_ref, col_ref, *, W, PAD, Cin):
    # x_ref:   (Cin, N + 2*PAD)   zero-padded lane-dense input, PAD = W + 1
    # w_ref:   (Cout, 9*Cin)      im2col weights, column = t*Cin + cin,
    #                             tap t = (dy+1)*3 + (dx+1)
    # b_ref:   (Cout, 1)          bias
    # m_ref:   (9, 1, N)          per-tap validity masks (zero padding and
    #                             row/image boundaries of the flat layout)
    # o_ref:   (Cout, N)          lane-dense conv output (pre pixel-shuffle)
    # col_ref: (9*Cin, N)         VMEM scratch: masked im2col slab
    Cout, N = o_ref.shape
    xp = x_ref[...]                                   # (Cin, N + 2*PAD)

    # Build the masked im2col slab with 9 static lane-window copies.
    t = 0
    for dy in (-1, 0, 1):
        for dx in (-1, 0, 1):
            start = PAD + dy * W + dx                 # static lane offset
            xs = xp[:, start:start + N]               # shifted view (Cin, N)
            col_ref[t * Cin:(t + 1) * Cin, :] = xs * m_ref[t]
            t += 1

    # One MXU matmul: (Cout, 9*Cin) @ (9*Cin, N) accumulated in f32.
    acc = lax.dot_general(
        w_ref[...], col_ref[...], (((1,), (0,)), ((), ())),
        preferred_element_type=jnp.float32)

    o_ref[...] = acc + b_ref[...]                     # VPU bias add, lane bcast


# ----------------------------------------------------------------------------
# Host-side constants: per-tap validity masks for the flattened layout
# ----------------------------------------------------------------------------
def _tap_masks(B, H, W):
    # masks[t, 0, p] == 1.0 iff the source pixel of tap t at flat position
    # p = b*H*W + h*W + w lies inside the same image (zero-padding otherwise).
    hh = np.arange(H)[:, None]
    ww = np.arange(W)[None, :]
    masks = np.zeros((9, 1, B * H * W), np.float32)
    t = 0
    for dy in (-1, 0, 1):
        for dx in (-1, 0, 1):
            valid = ((hh + dy >= 0) & (hh + dy < H) &
                     (ww + dx >= 0) & (ww + dx < W)).astype(np.float32)
            masks[t, 0, :] = np.tile(valid.reshape(-1), B)
            t += 1
    return masks


# ----------------------------------------------------------------------------
# Wrapper: layout plumbing + pallas_call + pixel_shuffle permutation
# ----------------------------------------------------------------------------
@functools.partial(jax.jit, static_argnames=("scale_factor",))
def ps_upsample(x, w, b, scale_factor):
    # x: (B, Cin, H, W); w: (out_feat*s*s, Cin, 3, 3); b: (out_feat*s*s,)
    B, Cin, H, W = x.shape
    Cout_total = w.shape[0]
    s = scale_factor
    out_feat = Cout_total // (s * s)
    N = B * H * W
    PAD = W + 1

    # Lane-dense slab: channels on sublanes, batch*spatial on lanes.
    x_flat = jnp.transpose(x, (1, 0, 2, 3)).reshape(Cin, N)
    x_pad = jnp.pad(x_flat, ((0, 0), (PAD, PAD)))                  # (Cin, N+2*PAD)
    # im2col weights: (Cout, Cin, ky, kx) -> (Cout, ky, kx, Cin) -> (Cout, 9*Cin)
    # so that column index = t*Cin + cin with t = ky*3 + kx.
    w_mat = jnp.transpose(w, (0, 2, 3, 1)).reshape(Cout_total, 9 * Cin)
    b2 = b.reshape(Cout_total, 1)
    masks = jnp.asarray(_tap_masks(B, H, W))                       # (9, 1, N)

    y = pl.pallas_call(
        functools.partial(_conv3x3_ps_kernel, W=W, PAD=PAD, Cin=Cin),
        out_shape=jax.ShapeDtypeStruct((Cout_total, N), jnp.float32),
        grid=(1,),
        in_specs=[
            pl.BlockSpec((Cin, N + 2 * PAD), lambda i: (0, 0)),
            pl.BlockSpec((Cout_total, 9 * Cin), lambda i: (0, 0)),
            pl.BlockSpec((Cout_total, 1), lambda i: (0, 0)),
            pl.BlockSpec((9, 1, N), lambda i: (0, 0, 0)),
        ],
        out_specs=pl.BlockSpec((Cout_total, N), lambda i: (0, 0)),
        scratch_shapes=[pltpu.VMEM((9 * Cin, N), jnp.float32)],
        compiler_params=pltpu.CompilerParams(
            dimension_semantics=("arbitrary",)),
    )(x_pad, w_mat, b2, masks)

    # Un-flatten: (Cout*s*s, B*H*W) -> (B, Cout*s*s, H, W).
    y = y.reshape(Cout_total, B, H, W).transpose(1, 0, 2, 3)
    # pixel_shuffle: out[b, c, h*s+i, w*s+j] = y[b, c*s*s + i*s + j, h, w].
    y = y.reshape(B, out_feat, s, s, H, W)
    y = jnp.transpose(y, (0, 1, 4, 2, 5, 3))
    return y.reshape(B, out_feat, H * s, W * s)


# ----------------------------------------------------------------------------
# Pure-JAX reference (mirrors the PyTorch module exactly) for verification
# ----------------------------------------------------------------------------
def reference_forward(x, w, b, scale_factor):
    y = lax.conv_general_dilated(
        x, w, window_strides=(1, 1), padding=((1, 1), (1, 1)),
        dimension_numbers=("NCHW", "OIHW", "NCHW"),
        precision=lax.Precision.HIGHEST)
    y = y + b[None, :, None, None]
    B, C2, H, W = y.shape
    s = scale_factor
    C = C2 // (s * s)
    y = y.reshape(B, C, s, s, H, W)
    y = jnp.transpose(y, (0, 1, 4, 2, 5, 3))
    return y.reshape(B, C, H * s, W * s)


if __name__ == "__main__":
    B, in_feat, H, W = 2, 4, 16, 16
    out_feat, scale = 8, 2          # up_conv: Conv2d(4, 8*2*2=32, 3, padding=1)

    key = jax.random.PRNGKey(0)
    kx, kw, kb = jax.random.split(key, 3)
    x = jax.random.normal(kx, (B, in_feat, H, W), jnp.float32)
    w = 0.1 * jax.random.normal(
        kw, (out_feat * scale * scale, in_feat, 3, 3), jnp.float32)
    b = 0.1 * jax.random.normal(kb, (out_feat * scale * scale,), jnp.float32)

    out = jax.block_until_ready(ps_upsample(x, w, b, scale))
    expected = jax.block_until_ready(reference_forward(x, w, b, scale))
    np.testing.assert_allclose(np.asarray(out), np.asarray(expected),
                               rtol=1e-4, atol=1e-4)
    print("KERNEL_OK")
</pallas_src>

<mosaic_0001>
module attributes {stable_mosaic.version = 11 : i64} {
  func.func @_conv3x3_ps_kernel(%arg0: i32, %arg1: memref<4x546xf32, #tpu.memory_space<vmem>>, %arg2: memref<32x36xf32, #tpu.memory_space<vmem>>, %arg3: memref<32x1xf32, #tpu.memory_space<vmem>>, %arg4: memref<9x1x512xf32, #tpu.memory_space<vmem>>, %arg5: memref<32x512xf32, #tpu.memory_space<vmem>>, %arg6: memref<36x512xf32, #tpu.memory_space<vmem>>) attributes {dimension_semantics = [#tpu.dimension_semantics<arbitrary>], iteration_bounds = array<i64: 1>, scalar_prefetch = 0 : i64, scratch_operands = 1 : i64, tpu.core_type = #tpu.core_type<tc>, window_params = [{pipeline_mode = #tpu.pipeline_mode<synchronous>, transform_indices = @transform_0, window_bounds = array<i64: 4, 546>}, {pipeline_mode = #tpu.pipeline_mode<synchronous>, transform_indices = @transform_1, window_bounds = array<i64: 32, 36>}, {pipeline_mode = #tpu.pipeline_mode<synchronous>, transform_indices = @transform_2, window_bounds = array<i64: 32, 1>}, {pipeline_mode = #tpu.pipeline_mode<synchronous>, transform_indices = @transform_3, window_bounds = array<i64: 9, 1, 512>}, {pipeline_mode = #tpu.pipeline_mode<synchronous>, transform_indices = @transform_4, window_bounds = array<i64: 32, 512>}]} {
    %c0 = arith.constant 0 : index
    %c0_0 = arith.constant 0 : index
    %0 = vector.load %arg1[%c0, %c0_0] : memref<4x546xf32, #tpu.memory_space<vmem>>, vector<4x546xf32>
    %1 = vector.extract_strided_slice %0 {offsets = [0, 0], sizes = [4, 512], strides = [1, 1]} : vector<4x546xf32> to vector<4x512xf32>
    %c0_1 = arith.constant 0 : index
    %c0_2 = arith.constant 0 : index
    %c0_3 = arith.constant 0 : index
    %2 = vector.load %arg4[%c0_1, %c0_2, %c0_3] : memref<9x1x512xf32, #tpu.memory_space<vmem>>, vector<1x1x512xf32>
    %3 = vector.shape_cast %2 : vector<1x1x512xf32> to vector<1x512xf32>
    %4 = vector.broadcast %3 : vector<1x512xf32> to vector<4x512xf32>
    %5 = arith.mulf %1, %4 : vector<4x512xf32>
    %c0_4 = arith.constant 0 : index
    %c0_5 = arith.constant 0 : index
    %6 = vector.load %arg6[%c0_4, %c0_5] : memref<36x512xf32, #tpu.memory_space<vmem>>, vector<4x512xf32>
    tpu.vector_store %arg6[%c0_4, %c0_5], %5 {strides = array<i32>} : memref<36x512xf32, #tpu.memory_space<vmem>>, vector<4x512xf32>,
    %7 = vector.extract_strided_slice %0 {offsets = [0, 1], sizes = [4, 512], strides = [1, 1]} : vector<4x546xf32> to vector<4x512xf32>
    %c1 = arith.constant 1 : index
    %c0_6 = arith.constant 0 : index
    %c0_7 = arith.constant 0 : index
    %8 = vector.load %arg4[%c1, %c0_6, %c0_7] : memref<9x1x512xf32, #tpu.memory_space<vmem>>, vector<1x1x512xf32>
    %9 = vector.shape_cast %8 : vector<1x1x512xf32> to vector<1x512xf32>
    %10 = vector.broadcast %9 : vector<1x512xf32> to vector<4x512xf32>
    %11 = arith.mulf %7, %10 : vector<4x512xf32>
    %c4 = arith.constant 4 : index
    %c0_8 = arith.constant 0 : index
    %12 = vector.load %arg6[%c4, %c0_8] : memref<36x512xf32, #tpu.memory_space<vmem>>, vector<4x512xf32>
    tpu.vector_store %arg6[%c4, %c0_8], %11 {strides = array<i32>} : memref<36x512xf32, #tpu.memory_space<vmem>>, vector<4x512xf32>,
    %13 = vector.extract_strided_slice %0 {offsets = [0, 2], sizes = [4, 512], strides = [1, 1]} : vector<4x546xf32> to vector<4x512xf32>
    %c2 = arith.constant 2 : index
    %c0_9 = arith.constant 0 : index
    %c0_10 = arith.constant 0 : index
    %14 = vector.load %arg4[%c2, %c0_9, %c0_10] : memref<9x1x512xf32, #tpu.memory_space<vmem>>, vector<1x1x512xf32>
    %15 = vector.shape_cast %14 : vector<1x1x512xf32> to vector<1x512xf32>
    %16 = vector.broadcast %15 : vector<1x512xf32> to vector<4x512xf32>
    %17 = arith.mulf %13, %16 : vector<4x512xf32>
    %c8 = arith.constant 8 : index
    %c0_11 = arith.constant 0 : index
    %18 = vector.load %arg6[%c8, %c0_11] : memref<36x512xf32, #tpu.memory_space<vmem>>, vector<4x512xf32>
    tpu.vector_store %arg6[%c8, %c0_11], %17 {strides = array<i32>} : memref<36x512xf32, #tpu.memory_space<vmem>>, vector<4x512xf32>,
    %19 = vector.extract_strided_slice %0 {offsets = [0, 16], sizes = [4, 512], strides = [1, 1]} : vector<4x546xf32> to vector<4x512xf32>
    %c3 = arith.constant 3 : index
    %c0_12 = arith.constant 0 : index
    %c0_13 = arith.constant 0 : index
    %20 = vector.load %arg4[%c3, %c0_12, %c0_13] : memref<9x1x512xf32, #tpu.memory_space<vmem>>, vector<1x1x512xf32>
    %21 = vector.shape_cast %20 : vector<1x1x512xf32> to vector<1x512xf32>
    %22 = vector.broadcast %21 : vector<1x512xf32> to vector<4x512xf32>
    %23 = arith.mulf %19, %22 : vector<4x512xf32>
    %c12 = arith.constant 12 : index
    %c0_14 = arith.constant 0 : index
    %24 = vector.load %arg6[%c12, %c0_14] : memref<36x512xf32, #tpu.memory_space<vmem>>, vector<4x512xf32>
    tpu.vector_store %arg6[%c12, %c0_14], %23 {strides = array<i32>} : memref<36x512xf32, #tpu.memory_space<vmem>>, vector<4x512xf32>,
    %25 = vector.extract_strided_slice %0 {offsets = [0, 17], sizes = [4, 512], strides = [1, 1]} : vector<4x546xf32> to vector<4x512xf32>
    %c4_15 = arith.constant 4 : index
    %c0_16 = arith.constant 0 : index
    %c0_17 = arith.constant 0 : index
    %26 = vector.load %arg4[%c4_15, %c0_16, %c0_17] : memref<9x1x512xf32, #tpu.memory_space<vmem>>, vector<1x1x512xf32>
    %27 = vector.shape_cast %26 : vector<1x1x512xf32> to vector<1x512xf32>
    %28 = vector.broadcast %27 : vector<1x512xf32> to vector<4x512xf32>
    %29 = arith.mulf %25, %28 : vector<4x512xf32>
    %c16 = arith.constant 16 : index
    %c0_18 = arith.constant 0 : index
    %30 = vector.load %arg6[%c16, %c0_18] : memref<36x512xf32, #tpu.memory_space<vmem>>, vector<4x512xf32>
    tpu.vector_store %arg6[%c16, %c0_18], %29 {strides = array<i32>} : memref<36x512xf32, #tpu.memory_space<vmem>>, vector<4x512xf32>,
    %31 = vector.extract_strided_slice %0 {offsets = [0, 18], sizes = [4, 512], strides = [1, 1]} : vector<4x546xf32> to vector<4x512xf32>
    %c5 = arith.constant 5 : index
    %c0_19 = arith.constant 0 : index
    %c0_20 = arith.constant 0 : index
    %32 = vector.load %arg4[%c5, %c0_19, %c0_20] : memref<9x1x512xf32, #tpu.memory_space<vmem>>, vector<1x1x512xf32>
    %33 = vector.shape_cast %32 : vector<1x1x512xf32> to vector<1x512xf32>
    %34 = vector.broadcast %33 : vector<1x512xf32> to vector<4x512xf32>
    %35 = arith.mulf %31, %34 : vector<4x512xf32>
    %c20 = arith.constant 20 : index
    %c0_21 = arith.constant 0 : index
    %36 = vector.load %arg6[%c20, %c0_21] : memref<36x512xf32, #tpu.memory_space<vmem>>, vector<4x512xf32>
    tpu.vector_store %arg6[%c20, %c0_21], %35 {strides = array<i32>} : memref<36x512xf32, #tpu.memory_space<vmem>>, vector<4x512xf32>,
    %37 = vector.extract_strided_slice %0 {offsets = [0, 32], sizes = [4, 512], strides = [1, 1]} : vector<4x546xf32> to vector<4x512xf32>
    %c6 = arith.constant 6 : index
    %c0_22 = arith.constant 0 : index
    %c0_23 = arith.constant 0 : index
    %38 = vector.load %arg4[%c6, %c0_22, %c0_23] : memref<9x1x512xf32, #tpu.memory_space<vmem>>, vector<1x1x512xf32>
    %39 = vector.shape_cast %38 : vector<1x1x512xf32> to vector<1x512xf32>
    %40 = vector.broadcast %39 : vector<1x512xf32> to vector<4x512xf32>
    %41 = arith.mulf %37, %40 : vector<4x512xf32>
    %c24 = arith.constant 24 : index
    %c0_24 = arith.constant 0 : index
    %42 = vector.load %arg6[%c24, %c0_24] : memref<36x512xf32, #tpu.memory_space<vmem>>, vector<4x512xf32>
    tpu.vector_store %arg6[%c24, %c0_24], %41 {strides = array<i32>} : memref<36x512xf32, #tpu.memory_space<vmem>>, vector<4x512xf32>,
    %43 = vector.extract_strided_slice %0 {offsets = [0, 33], sizes = [4, 512], strides = [1, 1]} : vector<4x546xf32> to vector<4x512xf32>
    %c7 = arith.constant 7 : index
    %c0_25 = arith.constant 0 : index
    %c0_26 = arith.constant 0 : index
    %44 = vector.load %arg4[%c7, %c0_25, %c0_26] : memref<9x1x512xf32, #tpu.memory_space<vmem>>, vector<1x1x512xf32>
    %45 = vector.shape_cast %44 : vector<1x1x512xf32> to vector<1x512xf32>
    %46 = vector.broadcast %45 : vector<1x512xf32> to vector<4x512xf32>
    %47 = arith.mulf %43, %46 : vector<4x512xf32>
    %c28 = arith.constant 28 : index
    %c0_27 = arith.constant 0 : index
    %48 = vector.load %arg6[%c28, %c0_27] : memref<36x512xf32, #tpu.memory_space<vmem>>, vector<4x512xf32>
    tpu.vector_store %arg6[%c28, %c0_27], %47 {strides = array<i32>} : memref<36x512xf32, #tpu.memory_space<vmem>>, vector<4x512xf32>,
    %49 = vector.extract_strided_slice %0 {offsets = [0, 34], sizes = [4, 512], strides = [1, 1]} : vector<4x546xf32> to vector<4x512xf32>
    %c8_28 = arith.constant 8 : index
    %c0_29 = arith.constant 0 : index
    %c0_30 = arith.constant 0 : index
    %50 = vector.load %arg4[%c8_28, %c0_29, %c0_30] : memref<9x1x512xf32, #tpu.memory_space<vmem>>, vector<1x1x512xf32>
    %51 = vector.shape_cast %50 : vector<1x1x512xf32> to vector<1x512xf32>
    %52 = vector.broadcast %51 : vector<1x512xf32> to vector<4x512xf32>
    %53 = arith.mulf %49, %52 : vector<4x512xf32>
    %c32 = arith.constant 32 : index
    %c0_31 = arith.constant 0 : index
    %54 = vector.load %arg6[%c32, %c0_31] : memref<36x512xf32, #tpu.memory_space<vmem>>, vector<4x512xf32>
    tpu.vector_store %arg6[%c32, %c0_31], %53 {strides = array<i32>} : memref<36x512xf32, #tpu.memory_space<vmem>>, vector<4x512xf32>,
    %c0_32 = arith.constant 0 : index
    %c0_33 = arith.constant 0 : index
    %55 = vector.load %arg2[%c0_32, %c0_33] : memref<32x36xf32, #tpu.memory_space<vmem>>, vector<32x36xf32>
    %c0_34 = arith.constant 0 : index
    %c0_35 = arith.constant 0 : index
    %56 = vector.load %arg6[%c0_34, %c0_35] : memref<36x512xf32, #tpu.memory_space<vmem>>, vector<36x512xf32>
    %cst = arith.constant dense<0.000000e+00> : vector<32x512xf32>
    %57 = tpu.matmul %55, %56, %cst {dimension_numbers = #tpu.dot_dimension_numbers<[1], [0], [0], [1], [0, 0, 1, 1], [], []>} : vector<32x36xf32>, vector<36x512xf32>, vector<32x512xf32> -> vector<32x512xf32>
    %c0_36 = arith.constant 0 : index
    %c0_37 = arith.constant 0 : index
    %58 = vector.load %arg3[%c0_36, %c0_37] : memref<32x1xf32, #tpu.memory_space<vmem>>, vector<32x1xf32>
    %59 = vector.broadcast %58 : vector<32x1xf32> to vector<32x512xf32>
    %60 = arith.addf %57, %59 : vector<32x512xf32>
    %c0_38 = arith.constant 0 : index
    %c0_39 = arith.constant 0 : index
    %61 = vector.load %arg5[%c0_38, %c0_39] : memref<32x512xf32, #tpu.memory_space<vmem>>, vector<32x512xf32>
    tpu.vector_store %arg5[%c0_38, %c0_39], %60 {strides = array<i32>} : memref<32x512xf32, #tpu.memory_space<vmem>>, vector<32x512xf32>,
    return
  }
  func.func @transform_0(%arg0: i32) -> (i32, i32) {
    %c0_i32 = arith.constant 0 : i32
    %c0_i32_0 = arith.constant 0 : i32
    %c0_i32_1 = arith.constant 0 : i32
    return %c0_i32, %c0_i32_0 : i32, i32
  }
  func.func @transform_1(%arg0: i32) -> (i32, i32) {
    %c0_i32 = arith.constant 0 : i32
    %c0_i32_0 = arith.constant 0 : i32
    %c0_i32_1 = arith.constant 0 : i32
    return %c0_i32, %c0_i32_0 : i32, i32
  }
  func.func @transform_2(%arg0: i32) -> (i32, i32) {
    %c0_i32 = arith.constant 0 : i32
    %c0_i32_0 = arith.constant 0 : i32
    %c0_i32_1 = arith.constant 0 : i32
    return %c0_i32, %c0_i32_0 : i32, i32
  }
  func.func @transform_3(%arg0: i32) -> (i32, i32, i32) {
    %c0_i32 = arith.constant 0 : i32
    %c0_i32_0 = arith.constant 0 : i32
    %c0_i32_1 = arith.constant 0 : i32
    %c0_i32_2 = arith.constant 0 : i32
    return %c0_i32, %c0_i32_0, %c0_i32_1 : i32, i32, i32
  }
  func.func @transform_4(%arg0: i32) -> (i32, i32) {
    %c0_i32 = arith.constant 0 : i32
    %c0_i32_0 = arith.constant 0 : i32
    %c0_i32_1 = arith.constant 0 : i32
    return %c0_i32, %c0_i32_0 : i32, i32
  }
}

</mosaic_0001>

<llo_original>
// kernel: ps_upsample.1
$region0: #{ps_upsample.1}
  #allocation0 [shape = 'u32[]', space=smem, size = 0x4, offset = 0x4, fixed_abs, tag = 'smem constant byte address 0x4 - core index']
  #allocation1 [shape = 'u32[144,128]{1,0:T(1,128)}', space=vmem, size = 0x12000, scoped, tag = 'internal scratch']
  #allocation2 [shape = 'f32[36,512]{1,0:T(8,128)}', space=vmem, size = 0x14000, scoped, tag = 'scratch operand']
  %s0 = inlined_call_operand.vmem [shape: f32[4,546], index: 0, kind: input, shape index: {}]
  %s1 = inlined_call_operand.vmem [shape: f32[32,36], index: 1, kind: input, shape index: {}]
  %s2 = inlined_call_operand.vmem [shape: f32[32,1], index: 2, kind: input, shape index: {}]
  %s3 = inlined_call_operand.vmem [shape: f32[9,1,512], index: 3, kind: input, shape index: {}]
  %s4 = inlined_call_operand.vmem [shape: f32[32,512], index: 4, kind: output, shape index: {}]
  %s5 = sld [smem:[#allocation0]]
  $region26: #{ps_upsample.1} parent=0
    _
  %s7 = ssub.s32 1, %s5
  %s8 = scalar_select 0, %s7, %s5
  // Predicated region
  $region2: #{ps_upsample.1} parent=0 // pred_check
    _
  $region3: #{ps_upsample.1} parent=0 // pred_check_branch
    %10 = sbr.rel (0) target = $region5
  $region4: #{ps_upsample.1} parent=0 // pred_region
    _
  $region5: #{ps_upsample.1} parent=0 // pred_fallthru
    _
  // Predicated region
  $region6: #{ps_upsample.1} parent=0 // pred_check
    _
  $region7: #{ps_upsample.1} parent=0 // pred_check_branch
    %12 = sbr.rel (0) target = $region9
  $region8: #{ps_upsample.1} parent=0 // pred_region
    _
  $region9: #{ps_upsample.1} parent=0 // pred_fallthru
    _
  // Predicated region
  $region10: #{ps_upsample.1} parent=0 // pred_check
    _
  $region11: #{ps_upsample.1} parent=0 // pred_check_branch
    %14 = sbr.rel (0) target = $region13
  $region12: #{ps_upsample.1} parent=0 // pred_region
    _
  $region13: #{ps_upsample.1} parent=0 // pred_fallthru
    _
  // Predicated region
  $region14: #{ps_upsample.1} parent=0 // pred_check
    _
  $region15: #{ps_upsample.1} parent=0 // pred_check_branch
    %16 = sbr.rel (0) target = $region17
  $region16: #{ps_upsample.1} parent=0 // pred_region
    _
  $region17: #{ps_upsample.1} parent=0 // pred_fallthru
    _
  %v17 = vld [vmem:[%s0] sm:$0xff]
  %v18 = vld [vmem:[%s0 + $0x8] sm:$0xff]
  %v19 = vld [vmem:[%s0 + $0x10] sm:$0xf]
  %v20 = vld [vmem:[%s3] sm:$0xf]
  %v22 = vlaneseq
  %v23 = vshrl.u32 %v22, 7
  %v24 = vsub.s32 0, %v23
  %v25 = vrot.slane %v20, %v24
  %v26 = vlaneseq
  %v27 = vshrl.u32 %v26, 7
  %v28 = vsub.s32 1, %v27
  %v29 = vrot.slane %v20, %v28
  %v30 = vlaneseq
  %v31 = vshrl.u32 %v30, 7
  %v32 = vsub.s32 2, %v31
  %v33 = vrot.slane %v20, %v32
  %v34 = vlaneseq
  %v35 = vshrl.u32 %v34, 7
  %v36 = vsub.s32 3, %v35
  %v37 = vrot.slane %v20, %v36
  %v38 = vcombine.low %v25, %v29
  %v39 = vcombine.low %v33, %v37
  %v42 = vmul.f32 %v17, %v38
  %v43 = vmul.f32 %v18, %v39
  %v46 = vcombine.high %v42, %v42
  %v47 = vcombine.high %v43, %v43
  %50 = vst [vmem:[#allocation2] sm:$0xf] %v42
  %51 = vst [vmem:[#allocation2 + $0x8] sm:$0xf] %v46
  %52 = vst [vmem:[#allocation2 + $0x10] sm:$0xf] %v43
  %53 = vst [vmem:[#allocation2 + $0x18] sm:$0xf] %v47
  %s54 = scalar_lea.vmem %s3, 4
  %v55 = vld [vmem:[%s54] sm:$0xf]
  %v57 = vlaneseq
  %v58 = vshrl.u32 %v57, 7
  %v59 = vsub.s32 0, %v58
  %v60 = vrot.slane %v55, %v59
  %v61 = vlaneseq
  %v62 = vshrl.u32 %v61, 7
  %v63 = vsub.s32 1, %v62
  %v64 = vrot.slane %v55, %v63
  %v65 = vlaneseq
  %v66 = vshrl.u32 %v65, 7
  %v67 = vsub.s32 2, %v66
  %v68 = vrot.slane %v55, %v67
  %v69 = vlaneseq
  %v70 = vshrl.u32 %v69, 7
  %v71 = vsub.s32 3, %v70
  %v72 = vrot.slane %v55, %v71
  %v73 = vcombine.low %v60, %v64
  %v74 = vcombine.low %v68, %v72
  %75 = vrot.lane.b32.xlu0 %v73, 1
  %v76 = vpop.permute.xlu0 %75
  %77 = vrot.lane.b32.xlu0 %v74, 1
  %v78 = vpop.permute.xlu0 %77
  %v79 = vrot.slane %v76, 4
  %v80 = vrot.slane %v78, 4
  %vm81 = vcmask 7168
  %v82 = vsel %vm81, %v79, %v76
  %vm83 = vcmask 1043456
  %v84 = vsel %vm83, %v79, %v80
  %v85 = vsel %vm81, %v84, %v78
  %v89 = vmul.f32 %v17, %v82
  %v90 = vmul.f32 %v18, %v85
  %v91 = vmul.f32 %v19, %v80
  %v95 = vcombine.low %v89, %v89
  %v96 = vcombine.low %v90, %v90
  %v97 = vcombine.low %v91, %v91
  %98 = vrot.lane.b32.xlu0 %v95, 127
  %v99 = vpop.permute.xlu0 %98
  %100 = vrot.lane.b32.xlu0 %v89, 127
  %v101 = vpop.permute.xlu0 %100
  %102 = vrot.lane.b32.xlu0 %v96, 127
  %v103 = vpop.permute.xlu0 %102
  %104 = vrot.lane.b32.xlu0 %v90, 127
  %v105 = vpop.permute.xlu0 %104
  %106 = vrot.lane.b32.xlu0 %v97, 127
  %v107 = vpop.permute.xlu0 %106
  %vm108 = vcmask 1039360
  %v109 = vsel %vm108, %v99, %v101
  %v110 = vsel %vm108, %v101, %v103
  %v111 = vsel %vm108, %v103, %v105
  %v112 = vsel %vm108, %v105, %v107
  %117 = vst [vmem:[#allocation2] sm:$0xf0] %v109
  %118 = vst [vmem:[#allocation2 + $0x8] sm:$0xf0] %v110
  %119 = vst [vmem:[#allocation2 + $0x10] sm:$0xf0] %v111
  %120 = vst [vmem:[#allocation2 + $0x18] sm:$0xf0] %v112
  %s121 = scalar_lea.vmem %s3, 8
  %v122 = vld [vmem:[%s121] sm:$0xf]
  %v124 = vlaneseq
  %v125 = vshrl.u32 %v124, 7
  %v126 = vsub.s32 0, %v125
  %v127 = vrot.slane %v122, %v126
  %v128 = vlaneseq
  %v129 = vshrl.u32 %v128, 7
  %v130 = vsub.s32 1, %v129
  %v131 = vrot.slane %v122, %v130
  %v132 = vlaneseq
  %v133 = vshrl.u32 %v132, 7
  %v134 = vsub.s32 2, %v133
  %v135 = vrot.slane %v122, %v134
  %v136 = vlaneseq
  %v137 = vshrl.u32 %v136, 7
  %v138 = vsub.s32 3, %v137
  %v139 = vrot.slane %v122, %v138
  %v140 = vcombine.low %v127, %v131
  %v141 = vcombine.low %v135, %v139
  %142 = vrot.lane.b32.xlu0 %v140, 2
  %v143 = vpop.permute.xlu0 %142
  %144 = vrot.lane.b32.xlu0 %v141, 2
  %v145 = vpop.permute.xlu0 %144
  %v146 = vrot.slane %v143, 4
  %v147 = vrot.slane %v145, 4
  %vm148 = vcmask 15360
  %v149 = vsel %vm148, %v146, %v143
  %v150 = vsel %vm83, %v146, %v147
  %v151 = vsel %vm148, %v150, %v145
  %v155 = vmul.f32 %v17, %v149
  %v156 = vmul.f32 %v18, %v151
  %v157 = vmul.f32 %v19, %v147
  %v161 = vcombine.high %v155, %v155
  %v162 = vcombine.high %v156, %v156
  %163 = vrot.lane.b32.xlu0 %v155, 126
  %v164 = vpop.permute.xlu0 %163
  %165 = vrot.lane.b32.xlu0 %v161, 126
  %v166 = vpop.permute.xlu0 %165
  %167 = vrot.lane.b32.xlu0 %v156, 126
  %v168 = vpop.permute.xlu0 %167
  %169 = vrot.lane.b32.xlu0 %v162, 126
  %v170 = vpop.permute.xlu0 %169
  %171 = vrot.lane.b32.xlu0 %v157, 126
  %v172 = vpop.permute.xlu0 %171
  %vm173 = vcmask 1031168
  %v174 = vsel %vm173, %v164, %v166
  %v175 = vsel %vm173, %v166, %v168
  %v176 = vsel %vm173, %v168, %v170
  %v177 = vsel %vm173, %v170, %v172
  %182 = vst [vmem:[#allocation2 + $0x20] sm:$0xf] %v174
  %183 = vst [vmem:[#allocation2 + $0x28] sm:$0xf] %v175
  %184 = vst [vmem:[#allocation2 + $0x30] sm:$0xf] %v176
  %185 = vst [vmem:[#allocation2 + $0x38] sm:$0xf] %v177
  %s186 = scalar_lea.vmem %s3, 12
  %v187 = vld [vmem:[%s186] sm:$0xf]
  %v189 = vlaneseq
  %v190 = vshrl.u32 %v189, 7
  %v191 = vsub.s32 0, %v190
  %v192 = vrot.slane %v187, %v191
  %v193 = vlaneseq
  %v194 = vshrl.u32 %v193, 7
  %v195 = vsub.s32 1, %v194
  %v196 = vrot.slane %v187, %v195
  %v197 = vlaneseq
  %v198 = vshrl.u32 %v197, 7
  %v199 = vsub.s32 2, %v198
  %v200 = vrot.slane %v187, %v199
  %v201 = vlaneseq
  %v202 = vshrl.u32 %v201, 7
  %v203 = vsub.s32 3, %v202
  %v204 = vrot.slane %v187, %v203
  %v205 = vcombine.low %v192, %v196
  %v206 = vcombine.low %v200, %v204
  %207 = vrot.lane.b32.xlu0 %v205, 16
  %v208 = vpop.permute.xlu0 %207
  %209 = vrot.lane.b32.xlu0 %v206, 16
  %v210 = vpop.permute.xlu0 %209
  %v211 = vrot.slane %v208, 4
  %v212 = vrot.slane %v210, 4
  %vm213 = vcmask 130048
  %v214 = vsel %vm213, %v211, %v208
  %v215 = vsel %vm83, %v211, %v212
  %v216 = vsel %vm213, %v215, %v210
  %v220 = vmul.f32 %v17, %v214
  %v221 = vmul.f32 %v18, %v216
  %v222 = vmul.f32 %v19, %v212
  %v226 = vcombine.low %v220, %v220
  %v227 = vcombine.low %v221, %v221
  %v228 = vcombine.low %v222, %v222
  %229 = vrot.lane.b32.xlu0 %v226, 112
  %v230 = vpop.permute.xlu0 %229
  %231 = vrot.lane.b32.xlu0 %v220, 112
  %v232 = vpop.permute.xlu0 %231
  %233 = vrot.lane.b32.xlu0 %v227, 112
  %v234 = vpop.permute.xlu0 %233
  %235 = vrot.lane.b32.xlu0 %v221, 112
  %v236 = vpop.permute.xlu0 %235
  %237 = vrot.lane.b32.xlu0 %v228, 112
  %v238 = vpop.permute.xlu0 %237
  %vm239 = vcmask 916480
  %v240 = vsel %vm239, %v230, %v232
  %v241 = vsel %vm239, %v232, %v234
  %v242 = vsel %vm239, %v234, %v236
  %v243 = vsel %vm239, %v236, %v238
  %248 = vst [vmem:[#allocation2 + $0x20] sm:$0xf0] %v240
  %249 = vst [vmem:[#allocation2 + $0x28] sm:$0xf0] %v241
  %250 = vst [vmem:[#allocation2 + $0x30] sm:$0xf0] %v242
  %251 = vst [vmem:[#allocation2 + $0x38] sm:$0xf0] %v243
  %s252 = scalar_lea.vmem %s3, 16
  %v253 = vld [vmem:[%s252] sm:$0xf]
  %v255 = vlaneseq
  %v256 = vshrl.u32 %v255, 7
  %v257 = vsub.s32 0, %v256
  %v258 = vrot.slane %v253, %v257
  %v259 = vlaneseq
  %v260 = vshrl.u32 %v259, 7
  %v261 = vsub.s32 1, %v260
  %v262 = vrot.slane %v253, %v261
  %v263 = vlaneseq
  %v264 = vshrl.u32 %v263, 7
  %v265 = vsub.s32 2, %v264
  %v266 = vrot.slane %v253, %v265
  %v267 = vlaneseq
  %v268 = vshrl.u32 %v267, 7
  %v269 = vsub.s32 3, %v268
  %v270 = vrot.slane %v253, %v269
  %v271 = vcombine.low %v258, %v262
  %v272 = vcombine.low %v266, %v270
  %273 = vrot.lane.b32.xlu0 %v271, 17
  %v274 = vpop.permute.xlu0 %273
  %275 = vrot.lane.b32.xlu0 %v272, 17
  %v276 = vpop.permute.xlu0 %275
  %v277 = vrot.slane %v274, 4
  %v278 = vrot.slane %v276, 4
  %vm279 = vcmask 138240
  %v280 = vsel %vm279, %v277, %v274
  %v281 = vsel %vm83, %v277, %v278
  %v282 = vsel %vm279, %v281, %v276
  %v286 = vmul.f32 %v17, %v280
  %v287 = vmul.f32 %v18, %v282
  %v288 = vmul.f32 %v19, %v278
  %v292 = vcombine.high %v286, %v286
  %v293 = vcombine.high %v287, %v287
  %294 = vrot.lane.b32.xlu0 %v286, 111
  %v295 = vpop.permute.xlu0 %294
  %296 = vrot.lane.b32.xlu0 %v292, 111
  %v297 = vpop.permute.xlu0 %296
  %298 = vrot.lane.b32.xlu0 %v287, 111
  %v299 = vpop.permute.xlu0 %298
  %300 = vrot.lane.b32.xlu0 %v293, 111
  %v301 = vpop.permute.xlu0 %300
  %302 = vrot.lane.b32.xlu0 %v288, 111
  %v303 = vpop.permute.xlu0 %302
  %vm304 = vcmask 908288
  %v305 = vsel %vm304, %v295, %v297
  %v306 = vsel %vm304, %v297, %v299
  %v307 = vsel %vm304, %v299, %v301
  %v308 = vsel %vm304, %v301, %v303
  %313 = vst [vmem:[#allocation2 + $0x40] sm:$0xf] %v305
  %314 = vst [vmem:[#allocation2 + $0x48] sm:$0xf] %v306
  %315 = vst [vmem:[#allocation2 + $0x50] sm:$0xf] %v307
  %316 = vst [vmem:[#allocation2 + $0x58] sm:$0xf] %v308
  %s317 = scalar_lea.vmem %s3, 20
  %v318 = vld [vmem:[%s317] sm:$0xf]
  %v320 = vlaneseq
  %v321 = vshrl.u32 %v320, 7
  %v322 = vsub.s32 0, %v321
  %v323 = vrot.slane %v318, %v322
  %v324 = vlaneseq
  %v325 = vshrl.u32 %v324, 7
  %v326 = vsub.s32 1, %v325
  %v327 = vrot.slane %v318, %v326
  %v328 = vlaneseq
  %v329 = vshrl.u32 %v328, 7
  %v330 = vsub.s32 2, %v329
  %v331 = vrot.slane %v318, %v330
  %v332 = vlaneseq
  %v333 = vshrl.u32 %v332, 7
  %v334 = vsub.s32 3, %v333
  %v335 = vrot.slane %v318, %v334
  %v336 = vcombine.low %v323, %v327
  %v337 = vcombine.low %v331, %v335
  %338 = vrot.lane.b32.xlu0 %v336, 18
  %v339 = vpop.permute.xlu0 %338
  %340 = vrot.lane.b32.xlu0 %v337, 18
  %v341 = vpop.permute.xlu0 %340
  %v342 = vrot.slane %v339, 4
  %v343 = vrot.slane %v341, 4
  %vm344 = vcmask 146432
  %v345 = vsel %vm344, %v342, %v339
  %v346 = vsel %vm83, %v342, %v343
  %v347 = vsel %vm344, %v346, %v341
  %v351 = vmul.f32 %v17, %v345
  %v352 = vmul.f32 %v18, %v347
  %v353 = vmul.f32 %v19, %v343
  %v357 = vcombine.low %v351, %v351
  %v358 = vcombine.low %v352, %v352
  %v359 = vcombine.low %v353, %v353
  %360 = vrot.lane.b32.xlu0 %v357, 110
  %v361 = vpop.permute.xlu0 %360
  %362 = vrot.lane.b32.xlu0 %v351, 110
  %v363 = vpop.permute.xlu0 %362
  %364 = vrot.lane.b32.xlu0 %v358, 110
  %v365 = vpop.permute.xlu0 %364
  %366 = vrot.lane.b32.xlu0 %v352, 110
  %v367 = vpop.permute.xlu0 %366
  %368 = vrot.lane.b32.xlu0 %v359, 110
  %v369 = vpop.permute.xlu0 %368
  %vm370 = vcmask 900096
  %v371 = vsel %vm370, %v361, %v363
  %v372 = vsel %vm370, %v363, %v365
  %v373 = vsel %vm370, %v365, %v367
  %v374 = vsel %vm370, %v367, %v369
  %379 = vst [vmem:[#allocation2 + $0x40] sm:$0xf0] %v371
  %380 = vst [vmem:[#allocation2 + $0x48] sm:$0xf0] %v372
  %381 = vst [vmem:[#allocation2 + $0x50] sm:$0xf0] %v373
  %382 = vst [vmem:[#allocation2 + $0x58] sm:$0xf0] %v374
  %s383 = scalar_lea.vmem %s3, 24
  %v384 = vld [vmem:[%s383] sm:$0xf]
  %v386 = vlaneseq
  %v387 = vshrl.u32 %v386, 7
  %v388 = vsub.s32 0, %v387
  %v389 = vrot.slane %v384, %v388
  %v390 = vlaneseq
  %v391 = vshrl.u32 %v390, 7
  %v392 = vsub.s32 1, %v391
  %v393 = vrot.slane %v384, %v392
  %v394 = vlaneseq
  %v395 = vshrl.u32 %v394, 7
  %v396 = vsub.s32 2, %v395
  %v397 = vrot.slane %v384, %v396
  %v398 = vlaneseq
  %v399 = vshrl.u32 %v398, 7
  %v400 = vsub.s32 3, %v399
  %v401 = vrot.slane %v384, %v400
  %v402 = vcombine.low %v389, %v393
  %v403 = vcombine.low %v397, %v401
  %404 = vrot.lane.b32.xlu0 %v402, 32
  %v405 = vpop.permute.xlu0 %404
  %406 = vrot.lane.b32.xlu0 %v403, 32
  %v407 = vpop.permute.xlu0 %406
  %v408 = vrot.slane %v405, 4
  %v409 = vrot.slane %v407, 4
  %vm410 = vcmask 261120
  %v411 = vsel %vm410, %v408, %v405
  %v412 = vsel %vm83, %v408, %v409
  %v413 = vsel %vm410, %v412, %v407
  %v417 = vmul.f32 %v17, %v411
  %v418 = vmul.f32 %v18, %v413
  %v419 = vmul.f32 %v19, %v409
  %v423 = vcombine.high %v417, %v417
  %v424 = vcombine.high %v418, %v418
  %425 = vrot.lane.b32.xlu0 %v417, 96
  %v426 = vpop.permute.xlu0 %425
  %427 = vrot.lane.b32.xlu0 %v423, 96
  %v428 = vpop.permute.xlu0 %427
  %429 = vrot.lane.b32.xlu0 %v418, 96
  %v430 = vpop.permute.xlu0 %429
  %431 = vrot.lane.b32.xlu0 %v424, 96
  %v432 = vpop.permute.xlu0 %431
  %433 = vrot.lane.b32.xlu0 %v419, 96
  %v434 = vpop.permute.xlu0 %433
  %vm435 = vcmask 785408
  %v436 = vsel %vm435, %v426, %v428
  %v437 = vsel %vm435, %v428, %v430
  %v438 = vsel %vm435, %v430, %v432
  %v439 = vsel %vm435, %v432, %v434
  %444 = vst [vmem:[#allocation2 + $0x60] sm:$0xf] %v436
  %445 = vst [vmem:[#allocation2 + $0x68] sm:$0xf] %v437
  %446 = vst [vmem:[#allocation2 + $0x70] sm:$0xf] %v438
  %447 = vst [vmem:[#allocation2 + $0x78] sm:$0xf] %v439
  %s448 = scalar_lea.vmem %s3, 28
  %v449 = vld [vmem:[%s448] sm:$0xf]
  %v451 = vlaneseq
  %v452 = vshrl.u32 %v451, 7
  %v453 = vsub.s32 0, %v452
  %v454 = vrot.slane %v449, %v453
  %v455 = vlaneseq
  %v456 = vshrl.u32 %v455, 7
  %v457 = vsub.s32 1, %v456
  %v458 = vrot.slane %v449, %v457
  %v459 = vlaneseq
  %v460 = vshrl.u32 %v459, 7
  %v461 = vsub.s32 2, %v460
  %v462 = vrot.slane %v449, %v461
  %v463 = vlaneseq
  %v464 = vshrl.u32 %v463, 7
  %v465 = vsub.s32 3, %v464
  %v466 = vrot.slane %v449, %v465
  %v467 = vcombine.low %v454, %v458
  %v468 = vcombine.low %v462, %v466
  %469 = vrot.lane.b32.xlu0 %v467, 33
  %v470 = vpop.permute.xlu0 %469
  %471 = vrot.lane.b32.xlu0 %v468, 33
  %v472 = vpop.permute.xlu0 %471
  %v473 = vrot.slane %v470, 4
  %v474 = vrot.slane %v472, 4
  %vm475 = vcmask 269312
  %v476 = vsel %vm475, %v473, %v470
  %v477 = vsel %vm83, %v473, %v474
  %v478 = vsel %vm475, %v477, %v472
  %v482 = vmul.f32 %v17, %v476
  %v483 = vmul.f32 %v18, %v478
  %v484 = vmul.f32 %v19, %v474
  %v488 = vcombine.low %v482, %v482
  %v489 = vcombine.low %v483, %v483
  %v490 = vcombine.low %v484, %v484
  %491 = vrot.lane.b32.xlu0 %v488, 95
  %v492 = vpop.permute.xlu0 %491
  %493 = vrot.lane.b32.xlu0 %v482, 95
  %v494 = vpop.permute.xlu0 %493
  %495 = vrot.lane.b32.xlu0 %v489, 95
  %v496 = vpop.permute.xlu0 %495
  %497 = vrot.lane.b32.xlu0 %v483, 95
  %v498 = vpop.permute.xlu0 %497
  %499 = vrot.lane.b32.xlu0 %v490, 95
  %v500 = vpop.permute.xlu0 %499
  %vm501 = vcmask 777216
  %v502 = vsel %vm501, %v492, %v494
  %v503 = vsel %vm501, %v494, %v496
  %v504 = vsel %vm501, %v496, %v498
  %v505 = vsel %vm501, %v498, %v500
  %510 = vst [vmem:[#allocation2 + $0x60] sm:$0xf0] %v502
  %511 = vst [vmem:[#allocation2 + $0x68] sm:$0xf0] %v503
  %512 = vst [vmem:[#allocation2 + $0x70] sm:$0xf0] %v504
  %513 = vst [vmem:[#allocation2 + $0x78] sm:$0xf0] %v505
  %s514 = scalar_lea.vmem %s3, 32
  %v515 = vld [vmem:[%s514] sm:$0xf]
  %v517 = vlaneseq
  %v518 = vshrl.u32 %v517, 7
  %v519 = vsub.s32 0, %v518
  %v520 = vrot.slane %v515, %v519
  %v521 = vlaneseq
  %v522 = vshrl.u32 %v521, 7
  %v523 = vsub.s32 1, %v522
  %v524 = vrot.slane %v515, %v523
  %v525 = vlaneseq
  %v526 = vshrl.u32 %v525, 7
  %v527 = vsub.s32 2, %v526
  %v528 = vrot.slane %v515, %v527
  %v529 = vlaneseq
  %v530 = vshrl.u32 %v529, 7
  %v531 = vsub.s32 3, %v530
  %v532 = vrot.slane %v515, %v531
  %v533 = vcombine.low %v520, %v524
  %v534 = vcombine.low %v528, %v532
  %535 = vrot.lane.b32.xlu0 %v533, 34
  %v536 = vpop.permute.xlu0 %535
  %537 = vrot.lane.b32.xlu0 %v534, 34
  %v538 = vpop.permute.xlu0 %537
  %v539 = vrot.slane %v536, 4
  %v540 = vrot.slane %v538, 4
  %vm541 = vcmask 277504
  %v542 = vsel %vm541, %v539, %v536
  %v543 = vsel %vm83, %v539, %v540
  %v544 = vsel %vm541, %v543, %v538
  %v548 = vmul.f32 %v17, %v542
  %v549 = vmul.f32 %v18, %v544
  %v550 = vmul.f32 %v19, %v540
  %v554 = vcombine.high %v548, %v548
  %v555 = vcombine.high %v549, %v549
  %556 = vrot.lane.b32.xlu0 %v548, 94
  %v557 = vpop.permute.xlu0 %556
  %558 = vrot.lane.b32.xlu0 %v554, 94
  %v559 = vpop.permute.xlu0 %558
  %560 = vrot.lane.b32.xlu0 %v549, 94
  %v561 = vpop.permute.xlu0 %560
  %562 = vrot.lane.b32.xlu0 %v555, 94
  %v563 = vpop.permute.xlu0 %562
  %564 = vrot.lane.b32.xlu0 %v550, 94
  %v565 = vpop.permute.xlu0 %564
  %vm566 = vcmask 769024
  %v567 = vsel %vm566, %v557, %v559
  %v568 = vsel %vm566, %v559, %v561
  %v569 = vsel %vm566, %v561, %v563
  %v570 = vsel %vm566, %v563, %v565
  %575 = vst [vmem:[#allocation2 + $0x80] sm:$0xf] %v567
  %576 = vst [vmem:[#allocation2 + $0x88] sm:$0xf] %v568
  %577 = vst [vmem:[#allocation2 + $0x90] sm:$0xf] %v569
  %578 = vst [vmem:[#allocation2 + $0x98] sm:$0xf] %v570
  %v579 = vld [vmem:[%s1] sm:$0xff]
  %v580 = vld [vmem:[%s1 + $0x8] sm:$0xff]
  %v581 = vld [vmem:[%s1 + $0x10] sm:$0xff]
  %v582 = vld [vmem:[%s1 + $0x18] sm:$0xff]
  %v583 = vld [vmem:[#allocation2] sm:$0xff]
  %v584 = vld [vmem:[#allocation2 + $0x8] sm:$0xff]
  %v585 = vld [vmem:[#allocation2 + $0x10] sm:$0xff]
  %v586 = vld [vmem:[#allocation2 + $0x18] sm:$0xff]
  %v587 = vld [vmem:[#allocation2 + $0x20] sm:$0xff]
  %v588 = vld [vmem:[#allocation2 + $0x28] sm:$0xff]
  %v589 = vld [vmem:[#allocation2 + $0x30] sm:$0xff]
  %v590 = vld [vmem:[#allocation2 + $0x38] sm:$0xff]
  %v591 = vld [vmem:[#allocation2 + $0x40] sm:$0xff]
  %v592 = vld [vmem:[#allocation2 + $0x48] sm:$0xff]
  %v593 = vld [vmem:[#allocation2 + $0x50] sm:$0xff]
  %v594 = vld [vmem:[#allocation2 + $0x58] sm:$0xff]
  %v595 = vld [vmem:[#allocation2 + $0x60] sm:$0xff]
  %v596 = vld [vmem:[#allocation2 + $0x68] sm:$0xff]
  %v597 = vld [vmem:[#allocation2 + $0x70] sm:$0xff]
  %v598 = vld [vmem:[#allocation2 + $0x78] sm:$0xff]
  %v599 = vld [vmem:[#allocation2 + $0x80] sm:$0xf]
  %v600 = vld [vmem:[#allocation2 + $0x88] sm:$0xf]
  %v601 = vld [vmem:[#allocation2 + $0x90] sm:$0xf]
  %v602 = vld [vmem:[#allocation2 + $0x98] sm:$0xf]
  %v603 = vld [vmem:[%s2] sm:$0xff]
  %v604 = vld [vmem:[%s2 + $0x8] sm:$0xff]
  %v605 = vld [vmem:[%s2 + $0x10] sm:$0xff]
  %v606 = vld [vmem:[%s2 + $0x18] sm:$0xff]
  %608 = vset.pattern.permute.xlu0 0
  %609 = vperm.xlu0 %608, %v603
  %v610 = vpop.permute.xlu0 %609
  %613 = vset.pattern.permute.xlu0 0
  %614 = vperm.xlu0 %613, %v604
  %v615 = vpop.permute.xlu0 %614
  %618 = vset.pattern.permute.xlu0 0
  %619 = vperm.xlu0 %618, %v605
  %v620 = vpop.permute.xlu0 %619
  %623 = vset.pattern.permute.xlu0 0
  %624 = vperm.xlu0 %623, %v606
  %v625 = vpop.permute.xlu0 %624
  %vm627 = vcmask 293888
  %v629 = vsel %vm627, %v579, 0
  %v632 = vsel %vm627, %v580, 0
  %v635 = vsel %vm627, %v581, 0
  %v638 = vsel %vm627, %v582, 0
  %v641 = vsel %vm83, %v599, 0
  %v644 = vsel %vm83, %v600, 0
  %v647 = vsel %vm83, %v601, 0
  %v650 = vsel %vm83, %v602, 0
  %652 = vmatprep.subr.mxu0 0.0
  %653 = vmatpush1.msra.mxu0 0.0
  %654 = vmatprep.subr.mxu0 0.0
  %655 = vmatpush1.msra.mxu0 0.0
  %656 = vmatprep.subr.mxu0 0.0
  %657 = vmatpush1.msra.mxu0 0.0
  %658 = vmatprep.subr.mxu0 0.0
  %659 = vmatpush1.msra.mxu0 0.0
  %660 = vmatprep.subr.mxu0 0.0
  %661 = vmatpush1.msra.mxu0 0.0
  %662 = vmatprep.subr.mxu0 0.0
  %663 = vmatpush1.msra.mxu0 0.0
  %664 = vmatprep.subr.mxu0 0.0
  %665 = vmatpush1.msra.mxu0 0.0
  %666 = vmatprep.subr.mxu0 0.0
  %667 = vmatpush1.msra.mxu0 0.0
  %668 = vmatprep.subr.mxu0 0.0
  %669 = vmatpush1.msra.mxu0 0.0
  %670 = vmatprep.subr.mxu0 0.0
  %671 = vmatpush1.msra.mxu0 0.0
  %672 = vmatprep.subr.mxu0 0.0
  %673 = vmatpush1.msra.mxu0 0.0
  %674 = vmatprep.subr.mxu0 %v644
  %675 = vmatpush1.msra.mxu0 %v641
  %676 = vmatprep.subr.mxu0 %v596
  %677 = vmatpush1.msra.mxu0 %v595
  %678 = vmatprep.subr.mxu0 %v592
  %679 = vmatpush1.msra.mxu0 %v591
  %680 = vmatprep.subr.mxu0 %v588
  %681 = vmatpush1.msra.mxu0 %v587
  %682 = vmatprep.subr.mxu0 %v584
  %683 = vmatpush1.msra.mxu0 %v583
  %684 = vmatprep.subr.mxu0 0.0
  %685 = vmatpush2.msra.mxu0 0.0
  %686 = vmatprep.subr.mxu0 0.0
  %687 = vmatpush2.msra.mxu0 0.0
  %688 = vmatprep.subr.mxu0 0.0
  %689 = vmatpush2.msra.mxu0 0.0
  %690 = vmatprep.subr.mxu0 0.0
  %691 = vmatpush2.msra.mxu0 0.0
  %692 = vmatprep.subr.mxu0 0.0
  %693 = vmatpush2.msra.mxu0 0.0
  %694 = vmatprep.subr.mxu0 0.0
  %695 = vmatpush2.msra.mxu0 0.0
  %696 = vmatprep.subr.mxu0 0.0
  %697 = vmatpush2.msra.mxu0 0.0
  %698 = vmatprep.subr.mxu0 0.0
  %699 = vmatpush2.msra.mxu0 0.0
  %700 = vmatprep.subr.mxu0 0.0
  %701 = vmatpush2.msra.mxu0 0.0
  %702 = vmatprep.subr.mxu0 0.0
  %703 = vmatpush2.msra.mxu0 0.0
  %704 = vmatprep.subr.mxu0 0.0
  %705 = vmatpush2.msra.mxu0 0.0
  %706 = vmatprep.subr.mxu0 0.0
  %707 = vmatpush2.msra.mxu0 0.0
  %708 = vmatprep.subr.mxu0 0.0
  %709 = vmatpush2.msra.mxu0 0.0
  %710 = vmatprep.subr.mxu0 0.0
  %711 = vmatpush2.msra.mxu0 0.0
  %712 = vmatprep.subr.mxu0 0.0
  %713 = vmatpush2.msra.mxu0 0.0
  %714 = vmatprep.subr.mxu0 0.0
  %715 = vmatpush2.msra.mxu0 0.0
  %716 = vmatprep.mubr.f32.mxu0 0.0
  %717 = vmatmul.mubr.f32.gmra.mxu0 %v629
  %v718 = vpop.f32.mrf.mxu0
  %v719 = vadd.f32 %v610, %v718
  %v720 = vpop.f32.mrf.mxu0
  %v721 = vadd.f32 %v610, %v720
  %722 = vmatprep.mubr.f32.mxu0 0.0
  %723 = vmatmul.mubr.f32.gmra.mxu0 %v632
  %v724 = vpop.f32.mrf.mxu0
  %v725 = vadd.f32 %v615, %v724
  %v726 = vpop.f32.mrf.mxu0
  %v727 = vadd.f32 %v615, %v726
  %728 = vmatprep.mubr.f32.mxu0 0.0
  %729 = vmatmul.mubr.f32.gmra.mxu0 %v635
  %v730 = vpop.f32.mrf.mxu0
  %v731 = vadd.f32 %v620, %v730
  %v732 = vpop.f32.mrf.mxu0
  %v733 = vadd.f32 %v620, %v732
  %734 = vmatprep.mubr.f32.mxu0 0.0
  %735 = vmatmul.mubr.f32.gmra.mxu0 %v638
  %v736 = vpop.f32.mrf.mxu0
  %v737 = vadd.f32 %v625, %v736
  %v738 = vpop.f32.mrf.mxu0
  %v739 = vadd.f32 %v625, %v738
  %740 = vdwg.mxu0
  %741 = vmatprep.subr.mxu0 0.0
  %742 = vmatpush1.msra.mxu0 0.0
  %743 = vmatprep.subr.mxu0 0.0
  %744 = vmatpush1.msra.mxu0 0.0
  %745 = vmatprep.subr.mxu0 0.0
  %746 = vmatpush1.msra.mxu0 0.0
  %747 = vmatprep.subr.mxu0 0.0
  %748 = vmatpush1.msra.mxu0 0.0
  %749 = vmatprep.subr.mxu0 0.0
  %750 = vmatpush1.msra.mxu0 0.0
  %751 = vmatprep.subr.mxu0 0.0
  %752 = vmatpush1.msra.mxu0 0.0
  %753 = vmatprep.subr.mxu0 0.0
  %754 = vmatpush1.msra.mxu0 0.0
  %755 = vmatprep.subr.mxu0 0.0
  %756 = vmatpush1.msra.mxu0 0.0
  %757 = vmatprep.subr.mxu0 0.0
  %758 = vmatpush1.msra.mxu0 0.0
  %759 = vmatprep.subr.mxu0 0.0
  %760 = vmatpush1.msra.mxu0 0.0
  %761 = vmatprep.subr.mxu0 0.0
  %762 = vmatpush1.msra.mxu0 0.0
  %763 = vmatprep.subr.mxu0 %v650
  %764 = vmatpush1.msra.mxu0 %v647
  %765 = vmatprep.subr.mxu0 %v598
  %766 = vmatpush1.msra.mxu0 %v597
  %767 = vmatprep.subr.mxu0 %v594
  %768 = vmatpush1.msra.mxu0 %v593
  %769 = vmatprep.subr.mxu0 %v590
  %770 = vmatpush1.msra.mxu0 %v589
  %771 = vmatprep.subr.mxu0 %v586
  %772 = vmatpush1.msra.mxu0 %v585
  %773 = vmatprep.subr.mxu0 0.0
  %774 = vmatpush2.msra.mxu0 0.0
  %775 = vmatprep.subr.mxu0 0.0
  %776 = vmatpush2.msra.mxu0 0.0
  %777 = vmatprep.subr.mxu0 0.0
  %778 = vmatpush2.msra.mxu0 0.0
  %779 = vmatprep.subr.mxu0 0.0
  %780 = vmatpush2.msra.mxu0 0.0
  %781 = vmatprep.subr.mxu0 0.0
  %782 = vmatpush2.msra.mxu0 0.0
  %783 = vmatprep.subr.mxu0 0.0
  %784 = vmatpush2.msra.mxu0 0.0
  %785 = vmatprep.subr.mxu0 0.0
  %786 = vmatpush2.msra.mxu0 0.0
  %787 = vmatprep.subr.mxu0 0.0
  %788 = vmatpush2.msra.mxu0 0.0
  %789 = vmatprep.subr.mxu0 0.0
  %790 = vmatpush2.msra.mxu0 0.0
  %791 = vmatprep.subr.mxu0 0.0
  %792 = vmatpush2.msra.mxu0 0.0
  %793 = vmatprep.subr.mxu0 0.0
  %794 = vmatpush2.msra.mxu0 0.0
  %795 = vmatprep.subr.mxu0 0.0
  %796 = vmatpush2.msra.mxu0 0.0
  %797 = vmatprep.subr.mxu0 0.0
  %798 = vmatpush2.msra.mxu0 0.0
  %799 = vmatprep.subr.mxu0 0.0
  %800 = vmatpush2.msra.mxu0 0.0
  %801 = vmatprep.subr.mxu0 0.0
  %802 = vmatpush2.msra.mxu0 0.0
  %803 = vmatprep.subr.mxu0 0.0
  %804 = vmatpush2.msra.mxu0 0.0
  %805 = vmatprep.mubr.f32.mxu0 0.0
  %806 = vmatmul.mubr.f32.gmra.mxu0 %v629
  %v807 = vpop.f32.mrf.mxu0
  %v808 = vadd.f32 %v610, %v807
  %v809 = vpop.f32.mrf.mxu0
  %v810 = vadd.f32 %v610, %v809
  %811 = vmatprep.mubr.f32.mxu0 0.0
  %812 = vmatmul.mubr.f32.gmra.mxu0 %v632
  %v813 = vpop.f32.mrf.mxu0
  %v814 = vadd.f32 %v615, %v813
  %v815 = vpop.f32.mrf.mxu0
  %v816 = vadd.f32 %v615, %v815
  %817 = vmatprep.mubr.f32.mxu0 0.0
  %818 = vmatmul.mubr.f32.gmra.mxu0 %v635
  %v819 = vpop.f32.mrf.mxu0
  %v820 = vadd.f32 %v620, %v819
  %v821 = vpop.f32.mrf.mxu0
  %v822 = vadd.f32 %v620, %v821
  %823 = vmatprep.mubr.f32.mxu0 0.0
  %824 = vmatmul.mubr.f32.gmra.mxu0 %v638
  %v825 = vpop.f32.mrf.mxu0
  %v826 = vadd.f32 %v625, %v825
  %v827 = vpop.f32.mrf.mxu0
  %v828 = vadd.f32 %v625, %v827
  %829 = vdwg.mxu0
  %830 = vst [vmem:[%s4] sm:$0xff] %v719
  %831 = vst [vmem:[%s4 + $0x8] sm:$0xff] %v721
  %832 = vst [vmem:[%s4 + $0x10] sm:$0xff] %v808
  %833 = vst [vmem:[%s4 + $0x18] sm:$0xff] %v810
  %834 = vst [vmem:[%s4 + $0x20] sm:$0xff] %v725
  %835 = vst [vmem:[%s4 + $0x28] sm:$0xff] %v727
  %836 = vst [vmem:[%s4 + $0x30] sm:$0xff] %v814
  %837 = vst [vmem:[%s4 + $0x38] sm:$0xff] %v816
  %838 = vst [vmem:[%s4 + $0x40] sm:$0xff] %v731
  %839 = vst [vmem:[%s4 + $0x48] sm:$0xff] %v733
  %840 = vst [vmem:[%s4 + $0x50] sm:$0xff] %v820
  %841 = vst [vmem:[%s4 + $0x58] sm:$0xff] %v822
  %842 = vst [vmem:[%s4 + $0x60] sm:$0xff] %v737
  %843 = vst [vmem:[%s4 + $0x68] sm:$0xff] %v739
  %844 = vst [vmem:[%s4 + $0x70] sm:$0xff] %v826
  %845 = vst [vmem:[%s4 + $0x78] sm:$0xff] %v828
  // Predicated region
  $region18: #{ps_upsample.1} parent=0 // pred_check
    _
  $region19: #{ps_upsample.1} parent=0 // pred_check_branch
    %847 = sbr.rel (0) target = $region21
  $region20: #{ps_upsample.1} parent=0 // pred_region
    _
  $region21: #{ps_upsample.1} parent=0 // pred_fallthru
    _
  // Predicated region
  $region22: #{ps_upsample.1} parent=0 // pred_check
    _
  $region23: #{ps_upsample.1} parent=0 // pred_check_branch
    %849 = sbr.rel (0) target = $region25
  $region24: #{ps_upsample.1} parent=0 // pred_region
    _
  $region25: #{ps_upsample.1} parent=0 // pred_fallthru
    _

</llo_original>
